<compile_context>
chip_gen: v7x
topology: tpu7x:2x2x1
jax: 0.10.0
libtpu: 0.0.40
codegen_flags: <defaults>
</compile_context>

<pallas_src>
import functools
import math

import jax
import jax.numpy as jnp
import numpy as np
from jax.experimental import pallas as pl
from jax.experimental.pallas import tpu as pltpu

REGRESSION_COUNT = 1      # miqa's module-level `regression_count`
FOCAL_GAMMA = 2.0         # monai.losses.FocalLoss() default
LANES = 128               # TPU lane width (samples are packed along lanes)
SUBLANES = 8              # f32 sublane count (quantities are packed along sublanes)


def _combined_loss_kernel(out_ref, tgt_ref, winv_ref, loss_ref, *, reg_count, d):
    x = out_ref[...]        # (D_pad, TB)  quantities on sublanes, samples on lanes
    t_raw = tgt_ref[...]    # (D_pad, TB)  targets; -1 marks "missing" (and padding)

    row = jax.lax.broadcasted_iota(jnp.int32, x.shape, 0)   # quantity index per element

    # --- regression (qa) term: sqrt(mean over 1 element) == |diff|, scaled by 10 (row 0) ---
    qa_term = jnp.where(row == 0, 10.0 * jnp.abs(x - t_raw), 0.0)

    # --- presence terms: MONAI sigmoid focal loss (gamma=2, alpha=None), skip t == -1 -------
    valid = (row >= reg_count) & (row < d) & (t_raw != -1.0)
    t = jnp.where(valid, t_raw, 0.0)

    e = jnp.exp(-jnp.abs(x))                        # EUP transcendental #1
    lp = jnp.log1p(e)                               # EUP transcendental #2
    bce = jnp.maximum(x, 0.0) - x * t + lp          # BCE-with-logits, numerically stable
    inv = pl.reciprocal(1.0 + e)                    # exact; pass approx=True if EUP ever binds
    # (1 - p_t) = sigmoid(-x*(2t-1)); rebuilt from e instead of a third exp (gamma == 2, hard t).
    one_minus_pt = jnp.where(x * (2.0 * t - 1.0) >= 0.0, e * inv, inv)
    focal = one_minus_pt * one_minus_pt * bce       # (1 - p_t)^gamma * BCE

    w = winv_ref[...]                               # (D_pad, 2): [:,0]=1/w[0], [:,1]=1/w[1]
    w_inv = jnp.where(t >= 0.5, w[:, 1:2], w[:, 0:1])   # 1 / binary_class_weights[int(t), i]
    presence_term = jnp.where(valid, focal * w_inv, 0.0)

    # Per-sample loss: reduce over the quantity (sublane) axis -> result is already lane-major,
    # stored as one lane-dense (1, TB) slab (no masked partial stores, no transpose).
    loss_ref[...] = jnp.sum(qa_term + presence_term, axis=0, keepdims=True)


def combined_loss_batched(output, target, binary_class_weights, *, block_b=1024):
    """Per-sample CombinedLoss for a batch: row b of the result equals the PyTorch module's
    forward applied to (output[b], target[b]).  output/target: (B, D) with
    D = regression_count + presence_count.  Presence targets must be hard labels in
    {-1, 0, 1} and binary_class_weights strictly nonzero (same assumptions as the module's
    `int(i_target)` indexing / division)."""
    output = jnp.asarray(output, jnp.float32)
    target = jnp.asarray(target, jnp.float32)
    w = jnp.asarray(binary_class_weights, jnp.float32)
    if output.ndim == 1:
        output = output[None, :]
        target = target[None, :]

    B, D = output.shape
    P = w.shape[-1]
    R = D - P
    assert R == REGRESSION_COUNT, "last dim must be regression_count + presence_count"
    assert block_b % LANES == 0

    d_pad = max(SUBLANES, ((D + SUBLANES - 1) // SUBLANES) * SUBLANES)
    if B <= block_b:
        tb = max(LANES, ((B + LANES - 1) // LANES) * LANES)   # single block == full array
    else:
        tb = block_b                                          # lane-dense sample blocks
    num_blocks = (B + tb - 1) // tb
    b_pad = num_blocks * tb

    # One-shot padded construction (samples on lanes, quantities on sublanes).
    out_p = jnp.zeros((d_pad, b_pad), jnp.float32).at[:D, :B].set(output.T)
    tgt_p = jnp.full((d_pad, b_pad), -1.0, jnp.float32).at[:D, :B].set(target.T)
    winv = jnp.ones((d_pad, 2), jnp.float32).at[R:D, :].set((1.0 / w).T)

    kernel = functools.partial(_combined_loss_kernel, reg_count=R, d=D)
    losses = pl.pallas_call(
        kernel,
        grid=(num_blocks,),
        in_specs=[
            pl.BlockSpec((d_pad, tb), lambda i: (0, i), memory_space=pltpu.MemorySpace.VMEM),
            pl.BlockSpec((d_pad, tb), lambda i: (0, i), memory_space=pltpu.MemorySpace.VMEM),
            pl.BlockSpec((d_pad, 2), lambda i: (0, 0), memory_space=pltpu.MemorySpace.VMEM),
        ],
        out_specs=pl.BlockSpec((1, tb), lambda i: (0, i), memory_space=pltpu.MemorySpace.VMEM),
        out_shape=jax.ShapeDtypeStruct((1, b_pad), jnp.float32),
        compiler_params=pltpu.CompilerParams(dimension_semantics=("parallel",)),
        cost_estimate=pl.CostEstimate(
            flops=25 * d_pad * b_pad,
            transcendentals=2 * d_pad * b_pad,
            bytes_accessed=(2 * d_pad * b_pad + 2 * d_pad + b_pad) * 4,
        ),
    )(out_p, tgt_p, winv)
    return losses[0, :B]


def combined_loss(output, target, binary_class_weights):
    """Single-sample loss — exact semantics of the PyTorch module's forward (scalar)."""
    return combined_loss_batched(jnp.reshape(output, (1, -1)),
                                 jnp.reshape(target, (1, -1)),
                                 binary_class_weights)[0]


# ----------------------------- pure-numpy reference -----------------------------
def _log_sigmoid_np(x):
    return np.minimum(x, 0.0) - np.log1p(np.exp(-np.abs(x)))


def _reference_losses(output, target, w):
    output = np.asarray(output, np.float64)
    target = np.asarray(target, np.float64)
    w = np.asarray(w, np.float64)
    losses = []
    for o, t in zip(output, target):
        qa_loss = math.sqrt(np.mean((o[0] - t[0]) ** 2))
        loss = 10.0 * qa_loss
        for i in range(w.shape[-1]):
            ti = t[REGRESSION_COUNT + i]
            if ti != -1:
                x = o[REGRESSION_COUNT + i]
                bce = x - x * ti - _log_sigmoid_np(x)
                focal = math.exp(FOCAL_GAMMA * _log_sigmoid_np(-x * (2.0 * ti - 1.0))) * bce
                loss = loss + focal / w[int(ti), i]
        losses.append(loss)
    return np.array(losses, np.float64)


if __name__ == "__main__":
    key = jax.random.PRNGKey(0)
    k_out, k_qa, k_pres, k_w = jax.random.split(key, 4)

    batch = 16
    presence_count = 4
    D = REGRESSION_COUNT + presence_count

    # Model output: qa regression score + presence logits, per sample.
    output = jax.random.normal(k_out, (batch, D), dtype=jnp.float32)
    # Target: qa score in [0,1], then hard presence labels in {-1, 0, 1} (-1 = missing).
    qa_target = jax.random.uniform(k_qa, (batch, 1), dtype=jnp.float32)
    presence_target = (jax.random.randint(k_pres, (batch, presence_count), 0, 3) - 1
                       ).astype(jnp.float32)
    target = jnp.concatenate([qa_target, presence_target], axis=-1)
    # binary_class_weights: (2, presence_count), strictly positive.
    binary_class_weights = 0.5 + jax.random.uniform(k_w, (2, presence_count), dtype=jnp.float32)

    losses = jax.block_until_ready(
        combined_loss_batched(output, target, binary_class_weights))
    single = jax.block_until_ready(
        combined_loss(output[0], target[0], binary_class_weights))

    ref = _reference_losses(np.asarray(output), np.asarray(target),
                            np.asarray(binary_class_weights))
    np.testing.assert_allclose(np.asarray(losses), ref, rtol=1e-5, atol=1e-5)
    np.testing.assert_allclose(float(single), float(ref[0]), rtol=1e-5, atol=1e-5)

    print("KERNEL_OK")
</pallas_src>

<mosaic_0001>
module attributes {stable_mosaic.version = 11 : i64} {
  func.func @_combined_loss_kernel(%arg0: i32, %arg1: memref<8x128xf32, #tpu.memory_space<vmem>>, %arg2: memref<8x128xf32, #tpu.memory_space<vmem>>, %arg3: memref<8x2xf32, #tpu.memory_space<vmem>>, %arg4: memref<1x128xf32, #tpu.memory_space<vmem>>) attributes {dimension_semantics = [#tpu.dimension_semantics<parallel>], iteration_bounds = array<i64: 1>, scalar_prefetch = 0 : i64, scratch_operands = 0 : i64, tpu.core_type = #tpu.core_type<tc>, window_params = [{transform_indices = @transform_0, window_bounds = array<i64: 8, 128>}, {transform_indices = @transform_1, window_bounds = array<i64: 8, 128>}, {pipeline_mode = #tpu.pipeline_mode<synchronous>, transform_indices = @transform_2, window_bounds = array<i64: 8, 2>}, {transform_indices = @transform_3, window_bounds = array<i64: 1, 128>}]} {
    %c0 = arith.constant 0 : index
    %c0_0 = arith.constant 0 : index
    %0 = vector.load %arg1[%c0, %c0_0] : memref<8x128xf32, #tpu.memory_space<vmem>>, vector<8x128xf32>
    %c0_1 = arith.constant 0 : index
    %c0_2 = arith.constant 0 : index
    %1 = vector.load %arg2[%c0_1, %c0_2] : memref<8x128xf32, #tpu.memory_space<vmem>>, vector<8x128xf32>
    %2 = tpu.iota {dimensions = array<i32: 0>} : vector<8x128xi32>
    %c0_i32 = arith.constant 0 : i32
    %3 = vector.broadcast %c0_i32 : i32 to vector<8x128xi32>
    %4 = arith.cmpi eq, %2, %3 : vector<8x128xi32>
    %5 = arith.subf %0, %1 : vector<8x128xf32>
    %6 = math.absf %5 : vector<8x128xf32>
    %cst = arith.constant 1.000000e+01 : f32
    %7 = vector.broadcast %cst : f32 to vector<8x128xf32>
    %8 = arith.mulf %7, %6 : vector<8x128xf32>
    %cst_3 = arith.constant 0.000000e+00 : f32
    %9 = vector.broadcast %cst_3 : f32 to vector<8x128xf32>
    %10 = arith.select %4, %8, %9 : vector<8x128xi1>, vector<8x128xf32>
    %c1_i32 = arith.constant 1 : i32
    %11 = vector.broadcast %c1_i32 : i32 to vector<8x128xi32>
    %12 = arith.cmpi sge, %2, %11 : vector<8x128xi32>
    %c5_i32 = arith.constant 5 : i32
    %13 = vector.broadcast %c5_i32 : i32 to vector<8x128xi32>
    %14 = arith.cmpi slt, %2, %13 : vector<8x128xi32>
    %15 = arith.andi %12, %14 : vector<8x128xi1>
    %cst_4 = arith.constant -1.000000e+00 : f32
    %16 = vector.broadcast %cst_4 : f32 to vector<8x128xf32>
    %17 = arith.cmpf one, %1, %16 : vector<8x128xf32>
    %18 = arith.andi %15, %17 : vector<8x128xi1>
    %cst_5 = arith.constant 0.000000e+00 : f32
    %19 = vector.broadcast %cst_5 : f32 to vector<8x128xf32>
    %20 = arith.select %18, %1, %19 : vector<8x128xi1>, vector<8x128xf32>
    %21 = math.absf %0 : vector<8x128xf32>
    %cst_6 = arith.constant 0.000000e+00 : f32
    %22 = vector.broadcast %cst_6 : f32 to vector<8x128xf32>
    %23 = arith.subf %22, %21 : vector<8x128xf32>
    %24 = math.exp %23 : vector<8x128xf32>
    %25 = math.log1p %24 : vector<8x128xf32>
    %cst_7 = arith.constant 0.000000e+00 : f32
    %26 = vector.broadcast %cst_7 : f32 to vector<8x128xf32>
    %27 = arith.maximumf %0, %26 : vector<8x128xf32>
    %28 = arith.mulf %0, %20 : vector<8x128xf32>
    %29 = arith.subf %27, %28 : vector<8x128xf32>
    %30 = arith.addf %29, %25 : vector<8x128xf32>
    %cst_8 = arith.constant 1.000000e+00 : f32
    %31 = vector.broadcast %cst_8 : f32 to vector<8x128xf32>
    %32 = arith.addf %31, %24 : vector<8x128xf32>
    %33 = tpu.reciprocal %32 : vector<8x128xf32> -> vector<8x128xf32>
    %cst_9 = arith.constant 2.000000e+00 : f32
    %34 = vector.broadcast %cst_9 : f32 to vector<8x128xf32>
    %35 = arith.mulf %34, %20 : vector<8x128xf32>
    %cst_10 = arith.constant 1.000000e+00 : f32
    %36 = vector.broadcast %cst_10 : f32 to vector<8x128xf32>
    %37 = arith.subf %35, %36 : vector<8x128xf32>
    %38 = arith.mulf %0, %37 : vector<8x128xf32>
    %cst_11 = arith.constant 0.000000e+00 : f32
    %39 = vector.broadcast %cst_11 : f32 to vector<8x128xf32>
    %40 = arith.cmpf oge, %38, %39 : vector<8x128xf32>
    %41 = arith.mulf %24, %33 : vector<8x128xf32>
    %42 = arith.select %40, %41, %33 : vector<8x128xi1>, vector<8x128xf32>
    %43 = arith.mulf %42, %42 : vector<8x128xf32>
    %44 = arith.mulf %43, %30 : vector<8x128xf32>
    %c0_12 = arith.constant 0 : index
    %c0_13 = arith.constant 0 : index
    %45 = vector.load %arg3[%c0_12, %c0_13] : memref<8x2xf32, #tpu.memory_space<vmem>>, vector<8x2xf32>
    %cst_14 = arith.constant 5.000000e-01 : f32
    %46 = vector.broadcast %cst_14 : f32 to vector<8x128xf32>
    %47 = arith.cmpf oge, %20, %46 : vector<8x128xf32>
    %48 = vector.extract_strided_slice %45 {offsets = [0, 1], sizes = [8, 1], strides = [1, 1]} : vector<8x2xf32> to vector<8x1xf32>
    %49 = vector.extract_strided_slice %45 {offsets = [0, 0], sizes = [8, 1], strides = [1, 1]} : vector<8x2xf32> to vector<8x1xf32>
    %50 = vector.shape_cast %48 : vector<8x1xf32> to vector<8x1xf32>
    %51 = vector.broadcast %50 : vector<8x1xf32> to vector<8x128xf32>
    %52 = vector.shape_cast %49 : vector<8x1xf32> to vector<8x1xf32>
    %53 = vector.broadcast %52 : vector<8x1xf32> to vector<8x128xf32>
    %54 = arith.select %47, %51, %53 : vector<8x128xi1>, vector<8x128xf32>
    %55 = arith.mulf %44, %54 : vector<8x128xf32>
    %cst_15 = arith.constant 0.000000e+00 : f32
    %56 = vector.broadcast %cst_15 : f32 to vector<8x128xf32>
    %57 = arith.select %18, %55, %56 : vector<8x128xi1>, vector<8x128xf32>
    %58 = arith.addf %10, %57 : vector<8x128xf32>
    %cst_16 = arith.constant dense<0.000000e+00> : vector<128xf32>
    %59 = vector.multi_reduction <add>, %58, %cst_16 [0] : vector<8x128xf32> to vector<128xf32>
    %60 = vector.shape_cast %59 : vector<128xf32> to vector<1x128xf32>
    %c0_17 = arith.constant 0 : index
    %c0_18 = arith.constant 0 : index
    %61 = vector.load %arg4[%c0_17, %c0_18] : memref<1x128xf32, #tpu.memory_space<vmem>>, vector<1x128xf32>
    tpu.vector_store %arg4[%c0_17, %c0_18], %60 {strides = array<i32>} : memref<1x128xf32, #tpu.memory_space<vmem>>, vector<1x128xf32>,
    return
  }
  func.func @transform_0(%arg0: i32) -> (i32, i32) {
    %c0_i32 = arith.constant 0 : i32
    %c0_i32_0 = arith.constant 0 : i32
    return %c0_i32, %arg0 : i32, i32
  }
  func.func @transform_1(%arg0: i32) -> (i32, i32) {
    %c0_i32 = arith.constant 0 : i32
    %c0_i32_0 = arith.constant 0 : i32
    return %c0_i32, %arg0 : i32, i32
  }
  func.func @transform_2(%arg0: i32) -> (i32, i32) {
    %c0_i32 = arith.constant 0 : i32
    %c0_i32_0 = arith.constant 0 : i32
    %c0_i32_1 = arith.constant 0 : i32
    return %c0_i32, %c0_i32_0 : i32, i32
  }
  func.func @transform_3(%arg0: i32) -> (i32, i32) {
    %c0_i32 = arith.constant 0 : i32
    %c0_i32_0 = arith.constant 0 : i32
    return %c0_i32, %arg0 : i32, i32
  }
}

</mosaic_0001>

<llo_original>
// kernel: tpu_custom_call.1
$region0: #{tpu_custom_call.1}
  #allocation0 [shape = 'u32[]', space=smem, size = 0x4, offset = 0x4, fixed_abs, tag = 'smem constant byte address 0x4 - core index']
  #allocation1 [shape = 'u32[144,128]{1,0:T(1,128)}', space=vmem, size = 0x12000, scoped, tag = 'internal scratch']
  %s0 = inlined_call_operand.vmem [shape: f32[8,128], index: 0, kind: input, shape index: {}]
  %s1 = inlined_call_operand.hbm [shape: f32[8,128], index: 1, kind: input, shape index: {}]
  %s2 = inlined_call_operand.vmem [shape: f32[8,2], index: 2, kind: input, shape index: {}]
  %s3 = inlined_call_operand.hbm [shape: f32[1,128], index: 3, kind: output, shape index: {}]
  %s4 = sld [smem:[#allocation0]]
  $region26: #{tpu_custom_call.1} parent=0
    _
  %s6 = ssub.s32 1, %s4
  %s7 = scalar_select 0, %s6, %s4
  $region1: #{tpu_custom_call.1} parent=0
    #allocation2 [shape = 'u8[4096]{0}', space=vmem, size = 0x1000, scoped, tag = 'input window, operand 1, single buffered']
    #allocation3 [shape = 's32[1]{0}', space=sflag, size = 0x4, scoped, tag = 'scoped memory for tpu_custom_call.1']
    #allocation4 [shape = 's32[1]{0}', space=sflag, size = 0x4, scoped, tag = 'scoped memory for tpu_custom_call.1']
    #allocation5 [shape = 'u8[512]{0}', space=vmem, size = 0x400, scoped, tag = 'output window, operand 0, single buffered']
    %8 = vsyncpa [#allocation3], 0
    %9 = vsyncpa [#allocation4], 0
    // Predicated region
    $region2: #{tpu_custom_call.1} parent=1 // pred_check
      _
    $region3: #{tpu_custom_call.1} parent=1 // pred_check_branch
      %11 = sbr.rel (0) target = $region5
    $region4: #{tpu_custom_call.1} parent=1 // pred_region
      _
    $region5: #{tpu_custom_call.1} parent=1 // pred_fallthru
      _
    // Predicated region
    $region6: #{tpu_custom_call.1} parent=1 // pred_check
      _
    $region7: #{tpu_custom_call.1} parent=1 // pred_check_branch
      %13 = sbr.rel (0) target = $region9
    $region8: #{tpu_custom_call.1} parent=1 // pred_region
      %s15 = ssub.s32 128, 128
      %16 = vsyncadd [#allocation3], %s15
      %s18 = sshll.u32 [#allocation2], 4
      %s19 = int_to_ptr.vmem [resolvable:$true] %s18
      %21 = dma.hbm_to_vmem [thread:$0]  %s1, 128, %s19, [#allocation3]
    $region9: #{tpu_custom_call.1} parent=1 // pred_fallthru
      _
    // Predicated region
    $region10: #{tpu_custom_call.1} parent=1 // pred_check
      _
    $region11: #{tpu_custom_call.1} parent=1 // pred_check_branch
      %23 = sbr.rel (0) target = $region13
    $region12: #{tpu_custom_call.1} parent=1 // pred_region
      _
    $region13: #{tpu_custom_call.1} parent=1 // pred_fallthru
      _
    // Predicated region
    $region14: #{tpu_custom_call.1} parent=1 // pred_check
      _
    $region15: #{tpu_custom_call.1} parent=1 // pred_check_branch
      %25 = sbr.rel (0) target = $region17
    $region16: #{tpu_custom_call.1} parent=1 // pred_region
      %26 = dma.done [#allocation3], 128
    $region17: #{tpu_custom_call.1} parent=1 // pred_fallthru
      _
    %v27 = vld [vmem:[%s0] sm:$0xff]
    %v28 = vld [vmem:[#allocation2] sm:$0xff]
    %v29 = vlaneseq
    %v30 = vshrl.u32 %v29, 7
    %vm31 = vcmp.eq.s32.totalorder %v30, 0
    %v32 = vsub.f32 %v27, %v28
    %v33 = vand.u32 2147483647, %v32
    %v34 = vmul.f32 %v33, 10.0
    %v35 = vsel %vm31, %v34, 0.0
    %vm36 = vcmp.ge.s32.totalorder %v30, 1
    %vm37 = vcmp.lt.s32.totalorder %v30, 5
    %vm38 = vmand %vm36, %vm37
    %vm39 = vcmp.ne.f32.partialorder %v28, -1.0
    %vm40 = vmand %vm38, %vm39
    %v41 = vsel %vm40, %v28, 0.0
    %v42 = vand.u32 2147483647, %v27
    %v43 = vsub.f32 0.0, %v42
    %v44 = vmul.f32 %v43, 1.442695
    %v45 = vpow.pop %v44
    %v46 = vadd.f32 %v45, 1.0
    %v47 = vlog2.pop %v46
    %v48 = vmul.f32 %v47, 0.6931472
    %v49 = vmul.f32 -0.5, %v45
    %v50 = vadd.f32 %v49, 1.0
    %v51 = vmul.f32 %v50, %v45
    %v52 = vand.u32 2147483647, %v45
    %vm53 = vcmp.lt.f32.partialorder %v52, 0.0004427343
    %v54 = vsel %vm53, %v51, %v48
    %v55 = vmax.f32 %v27, 0.0
    %v56 = vmul.f32 %v27, %v41
    %v57 = vsub.f32 %v55, %v56
    %v58 = vadd.f32 %v57, %v54
    %v59 = vadd.f32 %v45, 1.0
    %v60 = vrcp.pop %v59
    %v61 = vmul.f32 %v41, 2.0
    %v62 = vsub.f32 %v61, 1.0
    %v63 = vmul.f32 %v27, %v62
    %vm64 = vcmp.ge.f32.partialorder %v63, 0.0
    %v65 = vmul.f32 %v45, %v60
    %v66 = vsel %vm64, %v65, %v60
    %v67 = vmul.f32 %v66, %v66
    %v68 = vmul.f32 %v67, %v58
    %v69 = vld [vmem:[%s2] sm:$0xff]
    %vm70 = vcmp.ge.f32.partialorder %v41, 0.5
    %72 = vset.pattern.permute.xlu0 1
    %73 = vperm.xlu0 %72, %v69
    %v74 = vpop.permute.xlu0 %73
    %76 = vset.pattern.permute.xlu0 0
    %77 = vperm.xlu0 %76, %v69
    %v78 = vpop.permute.xlu0 %77
    %v80 = vsel %vm70, %v74, %v78
    %v81 = vmul.f32 %v68, %v80
    %v82 = vsel %vm40, %v81, 0.0
    %v83 = vadd.f32 %v35, %v82
    %v84 = vrot.slane %v83, 4
    %v85 = vadd.f32 %v83, %v84
    %v86 = vrot.slane %v85, 2
    %v87 = vadd.f32 %v85, %v86
    %v88 = vrot.slane %v87, 1
    %v89 = vadd.f32 %v87, %v88
    %90 = vst [vmem:[#allocation5] sm:$0x1] %v89
    // Predicated region
    $region18: #{tpu_custom_call.1} parent=1 // pred_check
      _
    $region19: #{tpu_custom_call.1} parent=1 // pred_check_branch
      %92 = sbr.rel (0) target = $region21
    $region20: #{tpu_custom_call.1} parent=1 // pred_region
      %s94 = ssub.s32 16, 16
      %95 = vsyncadd [#allocation4], %s94
      %s97 = sshll.u32 [#allocation5], 4
      %s98 = int_to_ptr.vmem [resolvable:$true] %s97
      %100 = dma.vmem_to_hbm [thread:$0]  %s98, 16, %s3, [#allocation4]
    $region21: #{tpu_custom_call.1} parent=1 // pred_fallthru
      _
    // Predicated region
    $region22: #{tpu_custom_call.1} parent=1 // pred_check
      _
    $region23: #{tpu_custom_call.1} parent=1 // pred_check_branch
      %102 = sbr.rel (0) target = $region25
    $region24: #{tpu_custom_call.1} parent=1 // pred_region
      %103 = dma.done [#allocation4], 16
    $region25: #{tpu_custom_call.1} parent=1 // pred_fallthru
      _
    %104 = vsyncpa [#allocation3], 1
    %105 = vsyncpa [#allocation4], 1

</llo_original>
